<compile_context>
chip_gen: v6e
topology: v6e:2x2x1
jax: 0.10.0
libtpu: 0.0.40
codegen_flags: <defaults>
</compile_context>

<pallas_src>
import jax
import jax.numpy as jnp
from jax.experimental import pallas as pl
from jax.experimental.pallas import tpu as pltpu

LANE = 128  # every feature / hidden / output dim is zero-padded to one lane tile


def _round_up(n, m):
    return ((n + m - 1) // m) * m


def _leaky_relu(x, negative_slope=0.01):
    return jnp.where(x > 0, x, negative_slope * x)


def mlp_kernel(x_ref, w_ref, b_ref, o_ref, xpad_ref):
    """Fused 4-layer MLP on one (TB, in_dim) batch tile.

    x_ref:    (TB, in_dim) f32    -- native-width input block
    w_ref:    (4, 128, 128) bf16  -- zero-padded weights, VMEM-resident
    b_ref:    (4, 128) f32        -- zero-padded biases, VMEM-resident
    o_ref:    (TB, 128) bf16      -- lane-dense output slab (cols >= out_dim are 0)
    xpad_ref: (TB, 128) bf16      -- VMEM staging buffer for the lane zero-pad
    """
    in_dim = x_ref.shape[1]
    tb = xpad_ref.shape[0]

    # Lane-pad the input inside VMEM (zero tail + masked head store) so every
    # matmul sees aligned 128-wide operands.  Zero padding is exact: padded
    # columns / hidden units contribute 0 and LeakyReLU(0) == 0.
    if in_dim < LANE:
        xpad_ref[:, in_dim:] = jnp.zeros((tb, LANE - in_dim), xpad_ref.dtype)
    xpad_ref[:, :in_dim] = x_ref[...].astype(xpad_ref.dtype)

    h = xpad_ref[...]
    for i in range(4):
        acc = jnp.dot(h, w_ref[i], preferred_element_type=jnp.float32)
        acc = acc + b_ref[i:i + 1, :]          # f32 bias add on the VPU
        if i < 3:
            h = _leaky_relu(acc).astype(xpad_ref.dtype)
        else:
            o_ref[...] = acc.astype(o_ref.dtype)


def prepare_params(params, compute_dtype=jnp.bfloat16):
    """Pack W1..W4 into a zero-padded (4, 128, 128) stack and b1..b4 into (4, 128)."""
    w_stack = jnp.zeros((4, LANE, LANE), jnp.float32)
    b_stack = jnp.zeros((4, LANE), jnp.float32)
    for i in range(4):
        W = params[f"W{i + 1}"]
        b = params[f"b{i + 1}"].reshape(-1)
        w_stack = w_stack.at[i, :W.shape[0], :W.shape[1]].set(W)
        b_stack = b_stack.at[i, :b.shape[0]].set(b)
    return w_stack.astype(compute_dtype), b_stack


def model_f_forward(x, params, *, block_b=1024, compute_dtype=jnp.bfloat16):
    """x: [B, 90] f32. params: W1..W4 stored [in, out], b1..b4 [1, out]. Returns [B, 10] f32.

    Internally produces a lane-dense (B, 128) bf16 slab; only the [:, :out_dim]
    slice is meaningful (never consume the padded columns directly).
    """
    B, in_dim = x.shape
    out_dim = params["W4"].shape[1]
    assert in_dim <= LANE and out_dim <= LANE

    w_stack, b_stack = prepare_params(params, compute_dtype)

    # Large batch tiles (the kernel is HBM/overhead-bound), always a multiple of
    # 16, and capped near B/2 so there are >= 2 grid steps for v7x's two TCs.
    TB = min(_round_up(block_b, 16), _round_up(pl.cdiv(B, 2), 16))
    TB = max(TB, 16)
    grid = (pl.cdiv(B, TB),)

    c_item = jnp.dtype(compute_dtype).itemsize
    # Scoped-VMEM estimate: double-buffered x/out blocks + staging scratch +
    # resident weight/bias stacks.  Only raise the limit when it nears v5e's
    # conservative 16 MiB default (only matters for TB >= ~4096).
    vmem_est = (2 * TB * LANE * 4 + 2 * TB * LANE * c_item + TB * LANE * c_item
                + 2 * (4 * LANE * LANE * c_item + 4 * LANE * 4))
    vmem_limit = None
    if vmem_est > 12 * 1024 * 1024:
        vmem_limit = min(int(vmem_est * 1.25) + (2 << 20), 100 * 1024 * 1024)

    dims = [in_dim] + [params[f"W{i}"].shape[1] for i in range(1, 5)]
    cost = pl.CostEstimate(
        flops=2 * B * sum(dims[i] * dims[i + 1] for i in range(4)),
        transcendentals=0,
        bytes_accessed=int(B * in_dim * 4 + 4 * LANE * LANE * c_item
                           + 4 * LANE * 4 + B * LANE * c_item),
    )

    out_slab = pl.pallas_call(
        mlp_kernel,
        out_shape=jax.ShapeDtypeStruct((B, LANE), compute_dtype),
        grid=grid,
        in_specs=[
            pl.BlockSpec((TB, in_dim), lambda i: (i, 0)),        # x, batch-blocked
            pl.BlockSpec((4, LANE, LANE), lambda i: (0, 0, 0)),  # weights, resident
            pl.BlockSpec((4, LANE), lambda i: (0, 0)),           # biases, resident
        ],
        out_specs=pl.BlockSpec((TB, LANE), lambda i: (i, 0)),    # lane-dense bf16 slab
        scratch_shapes=[pltpu.VMEM((TB, LANE), compute_dtype)],
        compiler_params=pltpu.CompilerParams(
            dimension_semantics=("parallel",),
            vmem_limit_bytes=vmem_limit),
        cost_estimate=cost,
    )(x, w_stack, b_stack)

    return out_slab[:, :out_dim].astype(jnp.float32)


def init_params(key, input_dim=90, output_dim=10):
    """Deterministic init mimicking nn.Linear default (uniform +/- 1/sqrt(fan_in)).
    Weights stored as [in, out] (transpose of PyTorch's [out, in])."""
    dims = [input_dim, 128, 64, 32, output_dim]
    params = {}
    keys = jax.random.split(key, 2 * (len(dims) - 1))
    for i in range(len(dims) - 1):
        fan_in, fan_out = dims[i], dims[i + 1]
        bound = 1.0 / (fan_in ** 0.5)
        params[f"W{i + 1}"] = jax.random.uniform(
            keys[2 * i], (fan_in, fan_out), jnp.float32, -bound, bound)
        params[f"b{i + 1}"] = jax.random.uniform(
            keys[2 * i + 1], (1, fan_out), jnp.float32, -bound, bound)
    return params


def reference_forward(x, params, compute_dtype=jnp.float32):
    """Pure-JAX reference with the same precision recipe as the kernel."""
    h = x.astype(compute_dtype)
    for i in range(1, 5):
        W = params[f"W{i}"].astype(compute_dtype)
        b = params[f"b{i}"].reshape(1, -1).astype(jnp.float32)
        h = jnp.dot(h, W, preferred_element_type=jnp.float32) + b
        if i < 4:
            h = jnp.where(h > 0, h, 0.01 * h).astype(compute_dtype)
    # Final store path in the kernel is f32 accum -> compute_dtype slab -> f32.
    return h.astype(compute_dtype).astype(jnp.float32)


if __name__ == "__main__":
    key = jax.random.PRNGKey(0)
    k_param, k_x = jax.random.split(key)

    B, input_dim, output_dim = 8, 90, 10
    params = init_params(k_param, input_dim, output_dim)
    x = jax.random.normal(k_x, (B, input_dim), jnp.float32)

    fwd = jax.jit(model_f_forward)
    out = jax.block_until_ready(fwd(x, params))
    assert out.shape == (B, output_dim)

    # Matched-precision (bf16 matmul inputs, f32 accum, bf16 output slab) reference.
    ref_bf16 = reference_forward(x, params, compute_dtype=jnp.bfloat16)
    assert jnp.allclose(out, ref_bf16, atol=2e-2, rtol=2e-2), \
        "mismatch vs matched-precision reference"

    # Loose sanity check vs full-f32 reference (bf16 rounding only).
    ref_f32 = reference_forward(x, params, compute_dtype=jnp.float32)
    assert jnp.allclose(out, ref_f32, atol=8e-2, rtol=8e-2), \
        "mismatch vs f32 reference"

    # Exercise a multi-step grid with a partial trailing batch block.
    B2 = 50
    x2 = jax.random.normal(jax.random.PRNGKey(1), (B2, input_dim), jnp.float32)
    out2 = jax.block_until_ready(fwd(x2, params))
    ref2 = reference_forward(x2, params, compute_dtype=jnp.bfloat16)
    assert out2.shape == (B2, output_dim)
    assert jnp.allclose(out2, ref2, atol=2e-2, rtol=2e-2), \
        "mismatch on multi-block / partial-block batch"

    print("KERNEL_OK")
</pallas_src>

<mosaic_0001>
module attributes {stable_mosaic.version = 11 : i64} {
  func.func @mlp_kernel(%arg0: i32, %arg1: memref<16x90xf32, #tpu.memory_space<vmem>>, %arg2: memref<4x128x128xbf16, #tpu.memory_space<vmem>>, %arg3: memref<4x128xf32, #tpu.memory_space<vmem>>, %arg4: memref<16x128xbf16, #tpu.memory_space<vmem>>, %arg5: memref<16x128xbf16, #tpu.memory_space<vmem>>) attributes {dimension_semantics = [#tpu.dimension_semantics<parallel>], iteration_bounds = array<i64: 1>, scalar_prefetch = 0 : i64, scratch_operands = 1 : i64, tpu.core_type = #tpu.core_type<tc>, window_params = [{transform_indices = @transform_0, window_bounds = array<i64: 16, 90>}, {pipeline_mode = #tpu.pipeline_mode<synchronous>, transform_indices = @transform_1, window_bounds = array<i64: 4, 128, 128>}, {pipeline_mode = #tpu.pipeline_mode<synchronous>, transform_indices = @transform_2, window_bounds = array<i64: 4, 128>}, {transform_indices = @transform_3, window_bounds = array<i64: 16, 128>}]} {
    %cst = arith.constant 0.000000e+00 : bf16
    %0 = vector.broadcast %cst : bf16 to vector<16x38xbf16>
    %c0 = arith.constant 0 : index
    %c90 = arith.constant 90 : index
    %1 = vector.load %arg5[%c0, %c90] : memref<16x128xbf16, #tpu.memory_space<vmem>>, vector<16x38xbf16>
    tpu.vector_store %arg5[%c0, %c90], %0 {strides = array<i32>} : memref<16x128xbf16, #tpu.memory_space<vmem>>, vector<16x38xbf16>,
    %c0_0 = arith.constant 0 : index
    %c0_1 = arith.constant 0 : index
    %2 = vector.load %arg1[%c0_0, %c0_1] : memref<16x90xf32, #tpu.memory_space<vmem>>, vector<16x90xf32>
    %3 = arith.truncf %2 : vector<16x90xf32> to vector<16x90xbf16>
    %c0_2 = arith.constant 0 : index
    %c0_3 = arith.constant 0 : index
    %4 = vector.load %arg5[%c0_2, %c0_3] : memref<16x128xbf16, #tpu.memory_space<vmem>>, vector<16x90xbf16>
    tpu.vector_store %arg5[%c0_2, %c0_3], %3 {strides = array<i32>} : memref<16x128xbf16, #tpu.memory_space<vmem>>, vector<16x90xbf16>,
    %c0_4 = arith.constant 0 : index
    %c0_5 = arith.constant 0 : index
    %5 = vector.load %arg5[%c0_4, %c0_5] : memref<16x128xbf16, #tpu.memory_space<vmem>>, vector<16x128xbf16>
    %c0_6 = arith.constant 0 : index
    %c0_7 = arith.constant 0 : index
    %c0_8 = arith.constant 0 : index
    %6 = vector.load %arg2[%c0_6, %c0_7, %c0_8] : memref<4x128x128xbf16, #tpu.memory_space<vmem>>, vector<1x128x128xbf16>
    %7 = vector.shape_cast %6 : vector<1x128x128xbf16> to vector<128x128xbf16>
    %cst_9 = arith.constant dense<0.000000e+00> : vector<16x128xf32>
    %8 = tpu.matmul %5, %7, %cst_9 {dimension_numbers = #tpu.dot_dimension_numbers<[1], [0], [0], [1], [0, 0, 1, 1], [], []>} : vector<16x128xbf16>, vector<128x128xbf16>, vector<16x128xf32> -> vector<16x128xf32>
    %c0_10 = arith.constant 0 : index
    %c0_11 = arith.constant 0 : index
    %9 = vector.load %arg3[%c0_10, %c0_11] : memref<4x128xf32, #tpu.memory_space<vmem>>, vector<1x128xf32>
    %10 = vector.broadcast %9 : vector<1x128xf32> to vector<16x128xf32>
    %11 = arith.addf %8, %10 : vector<16x128xf32>
    %cst_12 = arith.constant 0.000000e+00 : f32
    %12 = vector.broadcast %cst_12 : f32 to vector<16x128xf32>
    %13 = arith.cmpf ogt, %11, %12 : vector<16x128xf32>
    %cst_13 = arith.constant 0.00999999977 : f32
    %14 = vector.broadcast %cst_13 : f32 to vector<16x128xf32>
    %15 = arith.mulf %14, %11 : vector<16x128xf32>
    %16 = arith.select %13, %11, %15 : vector<16x128xi1>, vector<16x128xf32>
    %17 = arith.truncf %16 : vector<16x128xf32> to vector<16x128xbf16>
    %c1 = arith.constant 1 : index
    %c0_14 = arith.constant 0 : index
    %c0_15 = arith.constant 0 : index
    %18 = vector.load %arg2[%c1, %c0_14, %c0_15] : memref<4x128x128xbf16, #tpu.memory_space<vmem>>, vector<1x128x128xbf16>
    %19 = vector.shape_cast %18 : vector<1x128x128xbf16> to vector<128x128xbf16>
    %cst_16 = arith.constant dense<0.000000e+00> : vector<16x128xf32>
    %20 = tpu.matmul %17, %19, %cst_16 {dimension_numbers = #tpu.dot_dimension_numbers<[1], [0], [0], [1], [0, 0, 1, 1], [], []>} : vector<16x128xbf16>, vector<128x128xbf16>, vector<16x128xf32> -> vector<16x128xf32>
    %c1_17 = arith.constant 1 : index
    %c0_18 = arith.constant 0 : index
    %21 = vector.load %arg3[%c1_17, %c0_18] : memref<4x128xf32, #tpu.memory_space<vmem>>, vector<1x128xf32>
    %22 = vector.broadcast %21 : vector<1x128xf32> to vector<16x128xf32>
    %23 = arith.addf %20, %22 : vector<16x128xf32>
    %cst_19 = arith.constant 0.000000e+00 : f32
    %24 = vector.broadcast %cst_19 : f32 to vector<16x128xf32>
    %25 = arith.cmpf ogt, %23, %24 : vector<16x128xf32>
    %cst_20 = arith.constant 0.00999999977 : f32
    %26 = vector.broadcast %cst_20 : f32 to vector<16x128xf32>
    %27 = arith.mulf %26, %23 : vector<16x128xf32>
    %28 = arith.select %25, %23, %27 : vector<16x128xi1>, vector<16x128xf32>
    %29 = arith.truncf %28 : vector<16x128xf32> to vector<16x128xbf16>
    %c2 = arith.constant 2 : index
    %c0_21 = arith.constant 0 : index
    %c0_22 = arith.constant 0 : index
    %30 = vector.load %arg2[%c2, %c0_21, %c0_22] : memref<4x128x128xbf16, #tpu.memory_space<vmem>>, vector<1x128x128xbf16>
    %31 = vector.shape_cast %30 : vector<1x128x128xbf16> to vector<128x128xbf16>
    %cst_23 = arith.constant dense<0.000000e+00> : vector<16x128xf32>
    %32 = tpu.matmul %29, %31, %cst_23 {dimension_numbers = #tpu.dot_dimension_numbers<[1], [0], [0], [1], [0, 0, 1, 1], [], []>} : vector<16x128xbf16>, vector<128x128xbf16>, vector<16x128xf32> -> vector<16x128xf32>
    %c2_24 = arith.constant 2 : index
    %c0_25 = arith.constant 0 : index
    %33 = vector.load %arg3[%c2_24, %c0_25] : memref<4x128xf32, #tpu.memory_space<vmem>>, vector<1x128xf32>
    %34 = vector.broadcast %33 : vector<1x128xf32> to vector<16x128xf32>
    %35 = arith.addf %32, %34 : vector<16x128xf32>
    %cst_26 = arith.constant 0.000000e+00 : f32
    %36 = vector.broadcast %cst_26 : f32 to vector<16x128xf32>
    %37 = arith.cmpf ogt, %35, %36 : vector<16x128xf32>
    %cst_27 = arith.constant 0.00999999977 : f32
    %38 = vector.broadcast %cst_27 : f32 to vector<16x128xf32>
    %39 = arith.mulf %38, %35 : vector<16x128xf32>
    %40 = arith.select %37, %35, %39 : vector<16x128xi1>, vector<16x128xf32>
    %41 = arith.truncf %40 : vector<16x128xf32> to vector<16x128xbf16>
    %c3 = arith.constant 3 : index
    %c0_28 = arith.constant 0 : index
    %c0_29 = arith.constant 0 : index
    %42 = vector.load %arg2[%c3, %c0_28, %c0_29] : memref<4x128x128xbf16, #tpu.memory_space<vmem>>, vector<1x128x128xbf16>
    %43 = vector.shape_cast %42 : vector<1x128x128xbf16> to vector<128x128xbf16>
    %cst_30 = arith.constant dense<0.000000e+00> : vector<16x128xf32>
    %44 = tpu.matmul %41, %43, %cst_30 {dimension_numbers = #tpu.dot_dimension_numbers<[1], [0], [0], [1], [0, 0, 1, 1], [], []>} : vector<16x128xbf16>, vector<128x128xbf16>, vector<16x128xf32> -> vector<16x128xf32>
    %c3_31 = arith.constant 3 : index
    %c0_32 = arith.constant 0 : index
    %45 = vector.load %arg3[%c3_31, %c0_32] : memref<4x128xf32, #tpu.memory_space<vmem>>, vector<1x128xf32>
    %46 = vector.broadcast %45 : vector<1x128xf32> to vector<16x128xf32>
    %47 = arith.addf %44, %46 : vector<16x128xf32>
    %48 = arith.truncf %47 : vector<16x128xf32> to vector<16x128xbf16>
    %c0_33 = arith.constant 0 : index
    %c0_34 = arith.constant 0 : index
    %49 = vector.load %arg4[%c0_33, %c0_34] : memref<16x128xbf16, #tpu.memory_space<vmem>>, vector<16x128xbf16>
    tpu.vector_store %arg4[%c0_33, %c0_34], %48 {strides = array<i32>} : memref<16x128xbf16, #tpu.memory_space<vmem>>, vector<16x128xbf16>,
    return
  }
  func.func @transform_0(%arg0: i32) -> (i32, i32) {
    %c0_i32 = arith.constant 0 : i32
    %c0_i32_0 = arith.constant 0 : i32
    return %arg0, %c0_i32 : i32, i32
  }
  func.func @transform_1(%arg0: i32) -> (i32, i32, i32) {
    %c0_i32 = arith.constant 0 : i32
    %c0_i32_0 = arith.constant 0 : i32
    %c0_i32_1 = arith.constant 0 : i32
    %c0_i32_2 = arith.constant 0 : i32
    return %c0_i32, %c0_i32_0, %c0_i32_1 : i32, i32, i32
  }
  func.func @transform_2(%arg0: i32) -> (i32, i32) {
    %c0_i32 = arith.constant 0 : i32
    %c0_i32_0 = arith.constant 0 : i32
    %c0_i32_1 = arith.constant 0 : i32
    return %c0_i32, %c0_i32_0 : i32, i32
  }
  func.func @transform_3(%arg0: i32) -> (i32, i32) {
    %c0_i32 = arith.constant 0 : i32
    %c0_i32_0 = arith.constant 0 : i32
    return %arg0, %c0_i32 : i32, i32
  }
}

</mosaic_0001>

<llo_original>
// kernel: model_f_forward.1
$region0: #{model_f_forward.1}
  #allocation0 [shape = 'u32[]', space=smem, size = 0x4, offset = 0x4, fixed_abs, tag = 'smem constant byte address 0x4 - core index']
  #allocation1 [shape = 'u32[144,128]{1,0:T(1,128)}', space=vmem, size = 0x12000, scoped, tag = 'internal scratch']
  #allocation2 [shape = 'bf16[16,128]{1,0:T(8,128)(2,1)}', space=vmem, size = 0x1000, scoped, tag = 'scratch operand']
  %s0 = inlined_call_operand.vmem [shape: f32[8,90], index: 0, kind: input, shape index: {}]
  %s1 = inlined_call_operand.vmem [shape: bf16[4,128,128], index: 1, kind: input, shape index: {}]
  %s2 = inlined_call_operand.vmem [shape: f32[4,128], index: 2, kind: input, shape index: {}]
  %s3 = inlined_call_operand.vmem [shape: bf16[8,128], index: 3, kind: output, shape index: {}]
  %s4 = sld [smem:[#allocation0]]
  $region52: #{model_f_forward.1} parent=0
    _
  %s6 = ssub.s32 1, %s4
  %s7 = scalar_select 0, %s6, %s4
  $region1: #{model_f_forward.1} parent=0
    #allocation3 [shape = 'u8[4096]{0}', space=vmem, size = 0x1000, scoped, tag = 'output window, operand 0, single buffered']
    // Predicated region
    $region2: #{model_f_forward.1} parent=1 // pred_check
      _
    $region3: #{model_f_forward.1} parent=1 // pred_check_branch
      %9 = sbr.rel (0) target = $region5
    $region4: #{model_f_forward.1} parent=1 // pred_region
      _
    $region5: #{model_f_forward.1} parent=1 // pred_fallthru
      _
    // Predicated region
    $region6: #{model_f_forward.1} parent=1 // pred_check
      _
    $region7: #{model_f_forward.1} parent=1 // pred_check_branch
      %11 = sbr.rel (0) target = $region9
    $region8: #{model_f_forward.1} parent=1 // pred_region
      _
    $region9: #{model_f_forward.1} parent=1 // pred_fallthru
      _
    // Predicated region
    $region10: #{model_f_forward.1} parent=1 // pred_check
      _
    $region11: #{model_f_forward.1} parent=1 // pred_check_branch
      %13 = sbr.rel (0) target = $region13
    $region12: #{model_f_forward.1} parent=1 // pred_region
      _
    $region13: #{model_f_forward.1} parent=1 // pred_fallthru
      _
    %vm15 = vcmask 1044176
    %16 = vst.msk [vmem:[#allocation2] sm:$0xf] %vm15, 0
    %17 = vst.msk [vmem:[#allocation2 + $0x4] sm:$0xf] %vm15, 0
    %v18 = vld [vmem:[%s0] sm:$0xff]
    %v19 = vld [vmem:[%s0 + $0x8] sm:$0xff]
    %v20 = vpack.c.bf16 %v19, %v18
    %v22 = vunpack.c.l.b16 %v20
    %v23 = vunpack.c.h.b16 %v20
    %v24 = vpack.c.b16 %v22, %v22
    %v25 = vpack.c.b16 %v23, %v23
    %vm28 = vcmask 732160
    %29 = vst.msk [vmem:[#allocation2] sm:$0xf] %vm28, %v24
    %30 = vst.msk [vmem:[#allocation2 + $0x4] sm:$0xf] %vm28, %v25
    %v31 = vld [vmem:[#allocation2] sm:$0xf]
    %v32 = vld [vmem:[#allocation2 + $0x4] sm:$0xf]
    %v33 = vld [vmem:[%s1] sm:$0xf]
    %v34 = vld [vmem:[%s1 + $0x4] sm:$0xf]
    %v35 = vld [vmem:[%s1 + $0x8] sm:$0xf]
    %v36 = vld [vmem:[%s1 + $0xc] sm:$0xf]
    %v37 = vld [vmem:[%s1 + $0x10] sm:$0xf]
    %v38 = vld [vmem:[%s1 + $0x14] sm:$0xf]
    %v39 = vld [vmem:[%s1 + $0x18] sm:$0xf]
    %v40 = vld [vmem:[%s1 + $0x1c] sm:$0xf]
    %v41 = vld [vmem:[%s1 + $0x20] sm:$0xf]
    %v42 = vld [vmem:[%s1 + $0x24] sm:$0xf]
    %v43 = vld [vmem:[%s1 + $0x28] sm:$0xf]
    %v44 = vld [vmem:[%s1 + $0x2c] sm:$0xf]
    %v45 = vld [vmem:[%s1 + $0x30] sm:$0xf]
    %v46 = vld [vmem:[%s1 + $0x34] sm:$0xf]
    %v47 = vld [vmem:[%s1 + $0x38] sm:$0xf]
    %v48 = vld [vmem:[%s1 + $0x3c] sm:$0xf]
    %v49 = vld [vmem:[%s2] sm:$0x1]
    %v50 = vlaneseq
    %v51 = vshrl.u32 %v50, 7
    %v52 = vsub.s32 0, %v51
    %v53 = vrot.slane %v49, %v52
    %v56 = vunpack.c.l.b16 %v31
    %v57 = vunpack.c.l.b16 %v32
    %v58 = vpack.c.b16 %v57, %v56
    %v76 = vunpack.c.l.b16 %v33
    %v77 = vunpack.c.l.b16 %v34
    %v78 = vunpack.c.l.b16 %v35
    %v79 = vunpack.c.l.b16 %v36
    %v80 = vunpack.c.l.b16 %v37
    %v81 = vunpack.c.l.b16 %v38
    %v82 = vunpack.c.l.b16 %v39
    %v83 = vunpack.c.l.b16 %v40
    %v84 = vunpack.c.l.b16 %v41
    %v85 = vunpack.c.l.b16 %v42
    %v86 = vunpack.c.l.b16 %v43
    %v87 = vunpack.c.l.b16 %v44
    %v88 = vunpack.c.l.b16 %v45
    %v89 = vunpack.c.l.b16 %v46
    %v90 = vunpack.c.l.b16 %v47
    %v91 = vunpack.c.l.b16 %v48
    %v92 = vpack.c.b16 %v77, %v76
    %v93 = vpack.c.b16 %v79, %v78
    %v94 = vpack.c.b16 %v81, %v80
    %v95 = vpack.c.b16 %v83, %v82
    %v96 = vpack.c.b16 %v85, %v84
    %v97 = vpack.c.b16 %v87, %v86
    %v98 = vpack.c.b16 %v89, %v88
    %v99 = vpack.c.b16 %v91, %v90
    %108 = vmatprep.subr.bf16.mxu0 0
    %109 = vmatpush1.bf16.msra.mxu0 %v99
    %110 = vmatprep.subr.bf16.mxu0 0
    %111 = vmatpush1.bf16.msra.mxu0 %v98
    %112 = vmatprep.subr.bf16.mxu0 0
    %113 = vmatpush1.bf16.msra.mxu0 %v97
    %114 = vmatprep.subr.bf16.mxu0 0
    %115 = vmatpush1.bf16.msra.mxu0 %v96
    %116 = vmatprep.subr.bf16.mxu0 0
    %117 = vmatpush1.bf16.msra.mxu0 %v95
    %118 = vmatprep.subr.bf16.mxu0 0
    %119 = vmatpush1.bf16.msra.mxu0 %v94
    %120 = vmatprep.subr.bf16.mxu0 0
    %121 = vmatpush1.bf16.msra.mxu0 %v93
    %122 = vmatprep.subr.bf16.mxu0 0
    %123 = vmatpush1.bf16.msra.mxu0 %v92
    %124 = vmatprep.subr.bf16.mxu0 0
    %125 = vmatpush2.bf16.msra.mxu0 0
    %126 = vmatprep.subr.bf16.mxu0 0
    %127 = vmatpush2.bf16.msra.mxu0 0
    %128 = vmatprep.subr.bf16.mxu0 0
    %129 = vmatpush2.bf16.msra.mxu0 0
    %130 = vmatprep.subr.bf16.mxu0 0
    %131 = vmatpush2.bf16.msra.mxu0 0
    %132 = vmatprep.subr.bf16.mxu0 0
    %133 = vmatpush2.bf16.msra.mxu0 0
    %134 = vmatprep.subr.bf16.mxu0 0
    %135 = vmatpush2.bf16.msra.mxu0 0
    %136 = vmatprep.subr.bf16.mxu0 0
    %137 = vmatpush2.bf16.msra.mxu0 0
    %138 = vmatprep.subr.bf16.mxu0 0
    %139 = vmatpush2.bf16.msra.mxu0 0
    %140 = vmatprep.mubr.bf16.mxu0 0
    %141 = vmatmul.mubr.bf16.gmra.mxu0 %v58
    %v142 = vpop.f32.mrf.mxu0
    %v143 = vadd.f32 %v53, %v142
    %v144 = vpop.f32.mrf.mxu0
    %v145 = vpop.f32.mrf.mxu0
    %v146 = vadd.f32 %v53, %v145
    %v147 = vpop.f32.mrf.mxu0
    %148 = vdwg.mxu0
    %vm149 = vcmp.gt.f32.partialorder %v143, 0.0
    %vm150 = vcmp.gt.f32.partialorder %v146, 0.0
    %v151 = vmul.f32 %v143, 0.01
    %v152 = vmul.f32 %v146, 0.01
    %v153 = vsel %vm149, %v143, %v151
    %v154 = vsel %vm150, %v146, %v152
    %v155 = vpack.c.bf16 %v154, %v153
    %s156 = scalar_lea.vmem %s1, 64
    %v157 = vld [vmem:[%s156] sm:$0xf]
    %v158 = vld [vmem:[%s156 + $0x4] sm:$0xf]
    %v159 = vld [vmem:[%s156 + $0x8] sm:$0xf]
    %v160 = vld [vmem:[%s156 + $0xc] sm:$0xf]
    %v161 = vld [vmem:[%s156 + $0x10] sm:$0xf]
    %v162 = vld [vmem:[%s156 + $0x14] sm:$0xf]
    %v163 = vld [vmem:[%s156 + $0x18] sm:$0xf]
    %v164 = vld [vmem:[%s156 + $0x1c] sm:$0xf]
    %v165 = vld [vmem:[%s156 + $0x20] sm:$0xf]
    %v166 = vld [vmem:[%s156 + $0x24] sm:$0xf]
    %v167 = vld [vmem:[%s156 + $0x28] sm:$0xf]
    %v168 = vld [vmem:[%s156 + $0x2c] sm:$0xf]
    %v169 = vld [vmem:[%s156 + $0x30] sm:$0xf]
    %v170 = vld [vmem:[%s156 + $0x34] sm:$0xf]
    %v171 = vld [vmem:[%s156 + $0x38] sm:$0xf]
    %v172 = vld [vmem:[%s156 + $0x3c] sm:$0xf]
    %v173 = vld [vmem:[%s2 + $0x1] sm:$0x1]
    %v174 = vlaneseq
    %v175 = vshrl.u32 %v174, 7
    %v176 = vsub.s32 0, %v175
    %v177 = vrot.slane %v173, %v176
    %v194 = vunpack.c.l.b16 %v157
    %v195 = vunpack.c.l.b16 %v158
    %v196 = vunpack.c.l.b16 %v159
    %v197 = vunpack.c.l.b16 %v160
    %v198 = vunpack.c.l.b16 %v161
    %v199 = vunpack.c.l.b16 %v162
    %v200 = vunpack.c.l.b16 %v163
    %v201 = vunpack.c.l.b16 %v164
    %v202 = vunpack.c.l.b16 %v165
    %v203 = vunpack.c.l.b16 %v166
    %v204 = vunpack.c.l.b16 %v167
    %v205 = vunpack.c.l.b16 %v168
    %v206 = vunpack.c.l.b16 %v169
    %v207 = vunpack.c.l.b16 %v170
    %v208 = vunpack.c.l.b16 %v171
    %v209 = vunpack.c.l.b16 %v172
    %v210 = vpack.c.b16 %v195, %v194
    %v211 = vpack.c.b16 %v197, %v196
    %v212 = vpack.c.b16 %v199, %v198
    %v213 = vpack.c.b16 %v201, %v200
    %v214 = vpack.c.b16 %v203, %v202
    %v215 = vpack.c.b16 %v205, %v204
    %v216 = vpack.c.b16 %v207, %v206
    %v217 = vpack.c.b16 %v209, %v208
    %226 = vmatprep.subr.bf16.mxu0 0
    %227 = vmatpush1.bf16.msra.mxu0 %v217
    %228 = vmatprep.subr.bf16.mxu0 0
    %229 = vmatpush1.bf16.msra.mxu0 %v216
    %230 = vmatprep.subr.bf16.mxu0 0
    %231 = vmatpush1.bf16.msra.mxu0 %v215
    %232 = vmatprep.subr.bf16.mxu0 0
    %233 = vmatpush1.bf16.msra.mxu0 %v214
    %234 = vmatprep.subr.bf16.mxu0 0
    %235 = vmatpush1.bf16.msra.mxu0 %v213
    %236 = vmatprep.subr.bf16.mxu0 0
    %237 = vmatpush1.bf16.msra.mxu0 %v212
    %238 = vmatprep.subr.bf16.mxu0 0
    %239 = vmatpush1.bf16.msra.mxu0 %v211
    %240 = vmatprep.subr.bf16.mxu0 0
    %241 = vmatpush1.bf16.msra.mxu0 %v210
    %242 = vmatprep.subr.bf16.mxu0 0
    %243 = vmatpush2.bf16.msra.mxu0 0
    %244 = vmatprep.subr.bf16.mxu0 0
    %245 = vmatpush2.bf16.msra.mxu0 0
    %246 = vmatprep.subr.bf16.mxu0 0
    %247 = vmatpush2.bf16.msra.mxu0 0
    %248 = vmatprep.subr.bf16.mxu0 0
    %249 = vmatpush2.bf16.msra.mxu0 0
    %250 = vmatprep.subr.bf16.mxu0 0
    %251 = vmatpush2.bf16.msra.mxu0 0
    %252 = vmatprep.subr.bf16.mxu0 0
    %253 = vmatpush2.bf16.msra.mxu0 0
    %254 = vmatprep.subr.bf16.mxu0 0
    %255 = vmatpush2.bf16.msra.mxu0 0
    %256 = vmatprep.subr.bf16.mxu0 0
    %257 = vmatpush2.bf16.msra.mxu0 0
    %258 = vmatprep.mubr.bf16.mxu0 0
    %259 = vmatmul.mubr.bf16.gmra.mxu0 %v155
    %v260 = vpop.f32.mrf.mxu0
    %v261 = vadd.f32 %v177, %v260
    %v262 = vpop.f32.mrf.mxu0
    %v263 = vpop.f32.mrf.mxu0
    %v264 = vadd.f32 %v177, %v263
    %v265 = vpop.f32.mrf.mxu0
    %266 = vdwg.mxu0
    %vm267 = vcmp.gt.f32.partialorder %v261, 0.0
    %vm268 = vcmp.gt.f32.partialorder %v264, 0.0
    %v269 = vmul.f32 %v261, 0.01
    %v270 = vmul.f32 %v264, 0.01
    %v271 = vsel %vm267, %v261, %v269
    %v272 = vsel %vm268, %v264, %v270
    %v273 = vpack.c.bf16 %v272, %v271
    %s274 = scalar_lea.vmem %s1, 128
    %v275 = vld [vmem:[%s274] sm:$0xf]
    %v276 = vld [vmem:[%s274 + $0x4] sm:$0xf]
    %v277 = vld [vmem:[%s274 + $0x8] sm:$0xf]
    %v278 = vld [vmem:[%s274 + $0xc] sm:$0xf]
    %v279 = vld [vmem:[%s274 + $0x10] sm:$0xf]
    %v280 = vld [vmem:[%s274 + $0x14] sm:$0xf]
    %v281 = vld [vmem:[%s274 + $0x18] sm:$0xf]
    %v282 = vld [vmem:[%s274 + $0x1c] sm:$0xf]
    %v283 = vld [vmem:[%s274 + $0x20] sm:$0xf]
    %v284 = vld [vmem:[%s274 + $0x24] sm:$0xf]
    %v285 = vld [vmem:[%s274 + $0x28] sm:$0xf]
    %v286 = vld [vmem:[%s274 + $0x2c] sm:$0xf]
    %v287 = vld [vmem:[%s274 + $0x30] sm:$0xf]
    %v288 = vld [vmem:[%s274 + $0x34] sm:$0xf]
    %v289 = vld [vmem:[%s274 + $0x38] sm:$0xf]
    %v290 = vld [vmem:[%s274 + $0x3c] sm:$0xf]
    %v291 = vld [vmem:[%s2 + $0x2] sm:$0x1]
    %v292 = vlaneseq
    %v293 = vshrl.u32 %v292, 7
    %v294 = vsub.s32 0, %v293
    %v295 = vrot.slane %v291, %v294
    %v312 = vunpack.c.l.b16 %v275
    %v313 = vunpack.c.l.b16 %v276
    %v314 = vunpack.c.l.b16 %v277
    %v315 = vunpack.c.l.b16 %v278
    %v316 = vunpack.c.l.b16 %v279
    %v317 = vunpack.c.l.b16 %v280
    %v318 = vunpack.c.l.b16 %v281
    %v319 = vunpack.c.l.b16 %v282
    %v320 = vunpack.c.l.b16 %v283
    %v321 = vunpack.c.l.b16 %v284
    %v322 = vunpack.c.l.b16 %v285
    %v323 = vunpack.c.l.b16 %v286
    %v324 = vunpack.c.l.b16 %v287
    %v325 = vunpack.c.l.b16 %v288
    %v326 = vunpack.c.l.b16 %v289
    %v327 = vunpack.c.l.b16 %v290
    %v328 = vpack.c.b16 %v313, %v312
    %v329 = vpack.c.b16 %v315, %v314
    %v330 = vpack.c.b16 %v317, %v316
    %v331 = vpack.c.b16 %v319, %v318
    %v332 = vpack.c.b16 %v321, %v320
    %v333 = vpack.c.b16 %v323, %v322
    %v334 = vpack.c.b16 %v325, %v324
    %v335 = vpack.c.b16 %v327, %v326
    %344 = vmatprep.subr.bf16.mxu0 0
    %345 = vmatpush1.bf16.msra.mxu0 %v335
    %346 = vmatprep.subr.bf16.mxu0 0
    %347 = vmatpush1.bf16.msra.mxu0 %v334
    %348 = vmatprep.subr.bf16.mxu0 0
    %349 = vmatpush1.bf16.msra.mxu0 %v333
    %350 = vmatprep.subr.bf16.mxu0 0
    %351 = vmatpush1.bf16.msra.mxu0 %v332
    %352 = vmatprep.subr.bf16.mxu0 0
    %353 = vmatpush1.bf16.msra.mxu0 %v331
    %354 = vmatprep.subr.bf16.mxu0 0
    %355 = vmatpush1.bf16.msra.mxu0 %v330
    %356 = vmatprep.subr.bf16.mxu0 0
    %357 = vmatpush1.bf16.msra.mxu0 %v329
    %358 = vmatprep.subr.bf16.mxu0 0
    %359 = vmatpush1.bf16.msra.mxu0 %v328
    %360 = vmatprep.subr.bf16.mxu0 0
    %361 = vmatpush2.bf16.msra.mxu0 0
    %362 = vmatprep.subr.bf16.mxu0 0
    %363 = vmatpush2.bf16.msra.mxu0 0
    %364 = vmatprep.subr.bf16.mxu0 0
    %365 = vmatpush2.bf16.msra.mxu0 0
    %366 = vmatprep.subr.bf16.mxu0 0
    %367 = vmatpush2.bf16.msra.mxu0 0
    %368 = vmatprep.subr.bf16.mxu0 0
    %369 = vmatpush2.bf16.msra.mxu0 0
    %370 = vmatprep.subr.bf16.mxu0 0
    %371 = vmatpush2.bf16.msra.mxu0 0
    %372 = vmatprep.subr.bf16.mxu0 0
    %373 = vmatpush2.bf16.msra.mxu0 0
    %374 = vmatprep.subr.bf16.mxu0 0
    %375 = vmatpush2.bf16.msra.mxu0 0
    %376 = vmatprep.mubr.bf16.mxu0 0
    %377 = vmatmul.mubr.bf16.gmra.mxu0 %v273
    %v378 = vpop.f32.mrf.mxu0
    %v379 = vadd.f32 %v295, %v378
    %v380 = vpop.f32.mrf.mxu0
    %v381 = vpop.f32.mrf.mxu0
    %v382 = vadd.f32 %v295, %v381
    %v383 = vpop.f32.mrf.mxu0
    %384 = vdwg.mxu0
    %vm385 = vcmp.gt.f32.partialorder %v379, 0.0
    %vm386 = vcmp.gt.f32.partialorder %v382, 0.0
    %v387 = vmul.f32 %v379, 0.01
    %v388 = vmul.f32 %v382, 0.01
    %v389 = vsel %vm385, %v379, %v387
    %v390 = vsel %vm386, %v382, %v388
    %v391 = vpack.c.bf16 %v390, %v389
    %s392 = scalar_lea.vmem %s1, 192
    %v393 = vld [vmem:[%s392] sm:$0xf]
    %v394 = vld [vmem:[%s392 + $0x4] sm:$0xf]
    %v395 = vld [vmem:[%s392 + $0x8] sm:$0xf]
    %v396 = vld [vmem:[%s392 + $0xc] sm:$0xf]
    %v397 = vld [vmem:[%s392 + $0x10] sm:$0xf]
    %v398 = vld [vmem:[%s392 + $0x14] sm:$0xf]
    %v399 = vld [vmem:[%s392 + $0x18] sm:$0xf]
    %v400 = vld [vmem:[%s392 + $0x1c] sm:$0xf]
    %v401 = vld [vmem:[%s392 + $0x20] sm:$0xf]
    %v402 = vld [vmem:[%s392 + $0x24] sm:$0xf]
    %v403 = vld [vmem:[%s392 + $0x28] sm:$0xf]
    %v404 = vld [vmem:[%s392 + $0x2c] sm:$0xf]
    %v405 = vld [vmem:[%s392 + $0x30] sm:$0xf]
    %v406 = vld [vmem:[%s392 + $0x34] sm:$0xf]
    %v407 = vld [vmem:[%s392 + $0x38] sm:$0xf]
    %v408 = vld [vmem:[%s392 + $0x3c] sm:$0xf]
    %v409 = vld [vmem:[%s2 + $0x3] sm:$0x1]
    %v410 = vlaneseq
    %v411 = vshrl.u32 %v410, 7
    %v412 = vsub.s32 0, %v411
    %v413 = vrot.slane %v409, %v412
    %v430 = vunpack.c.l.b16 %v393
    %v431 = vunpack.c.l.b16 %v394
    %v432 = vunpack.c.l.b16 %v395
    %v433 = vunpack.c.l.b16 %v396
    %v434 = vunpack.c.l.b16 %v397
    %v435 = vunpack.c.l.b16 %v398
    %v436 = vunpack.c.l.b16 %v399
    %v437 = vunpack.c.l.b16 %v400
    %v438 = vunpack.c.l.b16 %v401
    %v439 = vunpack.c.l.b16 %v402
    %v440 = vunpack.c.l.b16 %v403
    %v441 = vunpack.c.l.b16 %v404
    %v442 = vunpack.c.l.b16 %v405
    %v443 = vunpack.c.l.b16 %v406
    %v444 = vunpack.c.l.b16 %v407
    %v445 = vunpack.c.l.b16 %v408
    %v446 = vpack.c.b16 %v431, %v430
    %v447 = vpack.c.b16 %v433, %v432
    %v448 = vpack.c.b16 %v435, %v434
    %v449 = vpack.c.b16 %v437, %v436
    %v450 = vpack.c.b16 %v439, %v438
    %v451 = vpack.c.b16 %v441, %v440
    %v452 = vpack.c.b16 %v443, %v442
    %v453 = vpack.c.b16 %v445, %v444
    %462 = vmatprep.subr.bf16.mxu0 0
    %463 = vmatpush1.bf16.msra.mxu0 %v453
    %464 = vmatprep.subr.bf16.mxu0 0
    %465 = vmatpush1.bf16.msra.mxu0 %v452
    %466 = vmatprep.subr.bf16.mxu0 0
    %467 = vmatpush1.bf16.msra.mxu0 %v451
    %468 = vmatprep.subr.bf16.mxu0 0
    %469 = vmatpush1.bf16.msra.mxu0 %v450
    %470 = vmatprep.subr.bf16.mxu0 0
    %471 = vmatpush1.bf16.msra.mxu0 %v449
    %472 = vmatprep.subr.bf16.mxu0 0
    %473 = vmatpush1.bf16.msra.mxu0 %v448
    %474 = vmatprep.subr.bf16.mxu0 0
    %475 = vmatpush1.bf16.msra.mxu0 %v447
    %476 = vmatprep.subr.bf16.mxu0 0
    %477 = vmatpush1.bf16.msra.mxu0 %v446
    %478 = vmatprep.subr.bf16.mxu0 0
    %479 = vmatpush2.bf16.msra.mxu0 0
    %480 = vmatprep.subr.bf16.mxu0 0
    %481 = vmatpush2.bf16.msra.mxu0 0
    %482 = vmatprep.subr.bf16.mxu0 0
    %483 = vmatpush2.bf16.msra.mxu0 0
    %484 = vmatprep.subr.bf16.mxu0 0
    %485 = vmatpush2.bf16.msra.mxu0 0
    %486 = vmatprep.subr.bf16.mxu0 0
    %487 = vmatpush2.bf16.msra.mxu0 0
    %488 = vmatprep.subr.bf16.mxu0 0
    %489 = vmatpush2.bf16.msra.mxu0 0
    %490 = vmatprep.subr.bf16.mxu0 0
    %491 = vmatpush2.bf16.msra.mxu0 0
    %492 = vmatprep.subr.bf16.mxu0 0
    %493 = vmatpush2.bf16.msra.mxu0 0
    %494 = vmatprep.mubr.bf16.mxu0 0
    %495 = vmatmul.mubr.bf16.gmra.mxu0 %v391
    %v496 = vpop.f32.mrf.mxu0
    %v497 = vadd.f32 %v413, %v496
    %v498 = vpop.f32.mrf.mxu0
    %v499 = vpop.f32.mrf.mxu0
    %v500 = vadd.f32 %v413, %v499
    %v501 = vpop.f32.mrf.mxu0
    %502 = vdwg.mxu0
    %v503 = vpack.c.bf16 %v500, %v497
    %v505 = vunpack.c.l.b16 %v503
    %v506 = vunpack.c.h.b16 %v503
    %v507 = vpack.c.b16 %v505, %v505
    %v508 = vpack.c.b16 %v506, %v506
    %511 = vst [vmem:[#allocation3] sm:$0xf] %v507
    %512 = vst [vmem:[#allocation3 + $0x4] sm:$0xf] %v508
    // Predicated region
    $region14: #{model_f_forward.1} parent=1 // pred_check
      _
    $region15: #{model_f_forward.1} parent=1 // pred_check_branch
      %514 = sbr.rel (0) target = $region17
    $region16: #{model_f_forward.1} parent=1 // pred_region
      // Predicated region
      $region18: #{model_f_forward.1} parent=16 // pred_check
        _
      $region19: #{model_f_forward.1} parent=16 // pred_check_branch
        %516 = sbr.rel (0) target = $region21
      $region20: #{model_f_forward.1} parent=16 // pred_region
        // Predicated region
        $region22: #{model_f_forward.1} parent=20 // pred_check
          _
        $region23: #{model_f_forward.1} parent=20 // pred_check_branch
          %518 = sbr.rel target = $region25
        $region24: #{model_f_forward.1} parent=20 // pred_region
          // Predicated region
          $region37: #{model_f_forward.1} parent=24 // pred_check
            _
          $region38: #{model_f_forward.1} parent=24 // pred_check_branch
            %534 = sbr.rel (0) target = $region40
          $region39: #{model_f_forward.1} parent=24 // pred_region
            %s536 = ssub.s32 16, 1
            loop: start=0, step=1, limit=1
            $region41: #{model_f_forward.1} parent=39 // loop_pre_header
              _
            $region42: #{model_f_forward.1} parent=39 // loop_header
              %s538 = sphi 0, %s542
              %p539 = scmp.ge.s32.totalorder %s538, 1
              %s543 = sphi [#allocation3], [#allocation3]
              %s544 = sphi %s3, %s3
            $region43: #{model_f_forward.1} parent=39 // loop_header_branch
              %541 = sbr.rel (%p539) target = $region47
            $region44: #{model_f_forward.1} parent=39 // loop_body
              %v545 = vld [vmem:[%s543] sm:%s536]
              %546 = vst [vmem:[%s544] sm:%s536] %v545
            $region45: #{model_f_forward.1} parent=39 // loop_footer
              %s542 = sadd.s32 1, %s538
            $region46: #{model_f_forward.1} parent=39 // loop_footer_branch
              %537 = sbr.rel target = $region42
            $region47: #{model_f_forward.1} parent=39 // loop_exit
              _
          $region40: #{model_f_forward.1} parent=24 // pred_fallthru
            _
        $region25: #{model_f_forward.1} parent=20 // pred_fallthru
          _
        // Predicated region
        $region26: #{model_f_forward.1} parent=20 // pred_check
          _
        $region27: #{model_f_forward.1} parent=20 // pred_check_branch
          %520 = sbr.rel (0) target = $region29
        $region28: #{model_f_forward.1} parent=20 // pred_region
          %s522 = ssub.s32 16, 1
          loop: start=0, step=1, limit=1
          $region30: #{model_f_forward.1} parent=28 // loop_pre_header
            _
          $region31: #{model_f_forward.1} parent=28 // loop_header
            %s524 = sphi 0, %s528
            %p525 = scmp.ge.s32.totalorder %s524, 1
            %s529 = sphi [#allocation3], [#allocation3]
            %s530 = sphi %s3, %s3
          $region32: #{model_f_forward.1} parent=28 // loop_header_branch
            %527 = sbr.rel (%p525) target = $region36
          $region33: #{model_f_forward.1} parent=28 // loop_body
            %v531 = vld [vmem:[%s529] sm:%s522]
            %532 = vst [vmem:[%s530] sm:%s522] %v531
          $region34: #{model_f_forward.1} parent=28 // loop_footer
            %s528 = sadd.s32 1, %s524
          $region35: #{model_f_forward.1} parent=28 // loop_footer_branch
            %523 = sbr.rel target = $region31
          $region36: #{model_f_forward.1} parent=28 // loop_exit
            _
        $region29: #{model_f_forward.1} parent=20 // pred_fallthru
          _
      $region21: #{model_f_forward.1} parent=16 // pred_fallthru
        _
      %547 = vnop
    $region17: #{model_f_forward.1} parent=1 // pred_fallthru
      _
    // Predicated region
    $region48: #{model_f_forward.1} parent=1 // pred_check
      _
    $region49: #{model_f_forward.1} parent=1 // pred_check_branch
      %549 = sbr.rel (0) target = $region51
    $region50: #{model_f_forward.1} parent=1 // pred_region
      _
    $region51: #{model_f_forward.1} parent=1 // pred_fallthru
      _

</llo_original>
